<compile_context>
chip_gen: v7x
topology: tpu7x:2x2x1
jax: 0.10.0
libtpu: 0.0.40
codegen_flags: <defaults>
</compile_context>

<pallas_src>
import jax
import jax.numpy as jnp
from jax import lax
from jax.experimental import pallas as pl
from jax.experimental.pallas import tpu as pltpu


_CHUNK = 512       # lanes per inner-loop step (multiple of 128)
_MAX_TILE = 32768  # lanes per grid step (~1.4 MiB HBM traffic per step)


# ----------------------------------------------------------------------------
# Kernel (feature-major, VPU-only)
# ----------------------------------------------------------------------------
def _make_kernel(chunk, n_chunks):
    """out(6,T) = relu( W(6,5) @ xc(5,T) + b(6,1) ), batch on the lane axis."""

    def kernel(xc_ref, w_ref, bf_ref, out_ref):
        w = w_ref[...]                                                 # (6, 5)
        # Hoist loop-invariant lane-broadcasts (JAX does not CSE broadcasts).
        wcols = [jnp.broadcast_to(w[:, k:k + 1], (6, chunk)) for k in range(5)]
        bias = jnp.broadcast_to(bf_ref[...], (6, chunk))               # (6, chunk)

        def compute(off):
            xc = xc_ref[:, pl.ds(off, chunk)]                          # (5, chunk)
            y = bias
            for k in range(5):
                y = y + wcols[k] * xc[k:k + 1, :]                      # VPU FMA
            out_ref[:, pl.ds(off, chunk)] = jnp.maximum(y, 0.0)

        if n_chunks == 1:
            compute(0)
        else:
            def body(c, carry):
                compute(pl.multiple_of(c * chunk, chunk))
                return carry
            lax.fori_loop(0, n_chunks, body, 0, unroll=min(8, n_chunks))

    return kernel


# ----------------------------------------------------------------------------
# Host-side parameter folding (exact in fp32 up to roundoff)
# ----------------------------------------------------------------------------
def _fold_params(w1, b1, w2, b2):
    """w1 (4,2), b1 (4,), w2 (6,7), b2 (6,)  ->  W (6,5), b_fold (6,1).

    outT = W @ [x ; x1]^T + b_fold, where W = [w2a @ w1 | w2b].
    """
    w2a = w2[:, :4]                                  # (6, 4)  acts on fc1 output
    w2b = w2[:, 4:]                                  # (6, 3)  acts on x1
    w_x = w2a @ w1                                   # (6, 2)  folded fc1 -> fc2
    w_full = jnp.concatenate([w_x, w2b], axis=1)     # (6, 5)
    b_fold = (w2a @ b1 + b2).reshape(6, 1)           # (6, 1)
    return w_full, b_fold


def _choose_tile(B):
    """Return (tile, chunk, n_chunks). tile is the lane-block per grid step."""
    if B <= _CHUNK:
        return B, B, 1                               # single full block
    tile = min(_MAX_TILE, (B // _CHUNK) * _CHUNK)    # multiple of _CHUNK, <= B
    return tile, _CHUNK, tile // _CHUNK


# ----------------------------------------------------------------------------
# Pallas forward
# ----------------------------------------------------------------------------
def _forward_pallas(x, x1, w_full, b_fold):
    B = x.shape[0]
    # Layout plumbing: one fused, feature-major (lane-dense) operand stream.
    xcT = jnp.concatenate([x, x1], axis=1).T         # (5, B)
    tile, chunk, n_chunks = _choose_tile(B)
    grid = (pl.cdiv(B, tile),)

    outT = pl.pallas_call(
        _make_kernel(chunk, n_chunks),
        out_shape=jax.ShapeDtypeStruct((6, B), jnp.float32),
        grid=grid,
        in_specs=[
            pl.BlockSpec((5, tile), lambda i: (0, i)),   # fused [x | x1]^T tile
            pl.BlockSpec((6, 5), lambda i: (0, 0)),      # folded weight (resident)
            pl.BlockSpec((6, 1), lambda i: (0, 0)),      # folded bias (resident)
        ],
        out_specs=pl.BlockSpec((6, tile), lambda i: (0, i)),
        compiler_params=pltpu.CompilerParams(
            dimension_semantics=("parallel",),
        ),
    )(xcT, w_full, b_fold)
    return outT.T                                      # (B, 6)


def model_forward(x, x1, w1, b1, w2, b2, *, pallas_min_batch=4096, force_pallas=False):
    """Forward of the Model.  x (B,2), x1 (B,3), w1 (4,2), b1 (4,), w2 (6,7), b2 (6,)."""
    w_full, b_fold = _fold_params(w1, b1, w2, b2)
    if force_pallas or x.shape[0] >= pallas_min_batch:
        return _forward_pallas(x, x1, w_full, b_fold)
    # XLA-fused fallback (identical math) for tiny batches.
    return jax.nn.relu(
        jnp.concatenate([x, x1], axis=1) @ w_full.T + b_fold.reshape(1, -1)
    )


# ----------------------------------------------------------------------------
# Reference (unfolded, mirrors the PyTorch forward)
# ----------------------------------------------------------------------------
def _reference(x, x1, w1, b1, w2, b2):
    h = x @ w1.T + b1
    c = jnp.concatenate([h, x1], axis=1)
    return jax.nn.relu(c @ w2.T + b2)


if __name__ == "__main__":
    key = jax.random.PRNGKey(0)
    k_x, k_x1, k_w1, k_b1, k_w2, k_b2, k_big = jax.random.split(key, 7)

    # Parameters (PyTorch-style uniform bounds), fp32.
    w1 = jax.random.uniform(k_w1, (4, 2), minval=-(2 ** -0.5), maxval=2 ** -0.5)
    b1 = jax.random.uniform(k_b1, (4,), minval=-(2 ** -0.5), maxval=2 ** -0.5)
    w2 = jax.random.uniform(k_w2, (6, 7), minval=-(7 ** -0.5), maxval=7 ** -0.5)
    b2 = jax.random.uniform(k_b2, (6,), minval=-(7 ** -0.5), maxval=7 ** -0.5)

    # 1) Module's own shapes: x (2,2), x1 (2,3).  Force the Pallas path.
    B = 2
    x = jax.random.normal(k_x, (B, 2), dtype=jnp.float32)
    x1 = jax.random.normal(k_x1, (B, 3), dtype=jnp.float32)
    out = jax.block_until_ready(model_forward(x, x1, w1, b1, w2, b2, force_pallas=True))
    ref = _reference(x, x1, w1, b1, w2, b2)
    assert out.shape == (B, 6)
    assert jnp.allclose(out, ref, atol=1e-5, rtol=1e-4)

    # 2) Medium batch: multi-block grid with a partial trailing block.
    Bm = 1500
    km1, km2 = jax.random.split(k_big)
    xm = jax.random.normal(km1, (Bm, 2), dtype=jnp.float32)
    x1m = jax.random.normal(km2, (Bm, 3), dtype=jnp.float32)
    outm = jax.block_until_ready(model_forward(xm, x1m, w1, b1, w2, b2, force_pallas=True))
    refm = _reference(xm, x1m, w1, b1, w2, b2)
    assert outm.shape == (Bm, 6)
    assert jnp.allclose(outm, refm, atol=1e-4, rtol=1e-4)

    # 3) Large batch: 32768-lane tiles, 64-chunk inner loop, partial last block.
    Bb = 40000
    kb1, kb2 = jax.random.split(km2)
    xb = jax.random.normal(kb1, (Bb, 2), dtype=jnp.float32)
    x1b = jax.random.normal(kb2, (Bb, 3), dtype=jnp.float32)
    outb = jax.block_until_ready(model_forward(xb, x1b, w1, b1, w2, b2, force_pallas=True))
    refb = _reference(xb, x1b, w1, b1, w2, b2)
    assert outb.shape == (Bb, 6)
    assert jnp.allclose(outb, refb, atol=1e-4, rtol=1e-4)

    print("KERNEL_OK")
</pallas_src>

<mosaic_0001>
module attributes {stable_mosaic.version = 11 : i64} {
  func.func @kernel(%arg0: i32, %arg1: memref<5x2xf32, #tpu.memory_space<vmem>>, %arg2: memref<6x5xf32, #tpu.memory_space<vmem>>, %arg3: memref<6x1xf32, #tpu.memory_space<vmem>>, %arg4: memref<6x2xf32, #tpu.memory_space<vmem>>) attributes {dimension_semantics = [#tpu.dimension_semantics<parallel>], iteration_bounds = array<i64: 1>, scalar_prefetch = 0 : i64, scratch_operands = 0 : i64, tpu.core_type = #tpu.core_type<tc>, window_params = [{transform_indices = @transform_0, window_bounds = array<i64: 5, 2>}, {pipeline_mode = #tpu.pipeline_mode<synchronous>, transform_indices = @transform_1, window_bounds = array<i64: 6, 5>}, {pipeline_mode = #tpu.pipeline_mode<synchronous>, transform_indices = @transform_2, window_bounds = array<i64: 6, 1>}, {transform_indices = @transform_3, window_bounds = array<i64: 6, 2>}]} {
    %c0 = arith.constant 0 : index
    %c0_0 = arith.constant 0 : index
    %0 = vector.load %arg2[%c0, %c0_0] : memref<6x5xf32, #tpu.memory_space<vmem>>, vector<6x5xf32>
    %1 = vector.extract_strided_slice %0 {offsets = [0, 0], sizes = [6, 1], strides = [1, 1]} : vector<6x5xf32> to vector<6x1xf32>
    %2 = vector.shape_cast %1 : vector<6x1xf32> to vector<6x1xf32>
    %3 = vector.broadcast %2 : vector<6x1xf32> to vector<6x2xf32>
    %4 = vector.extract_strided_slice %0 {offsets = [0, 1], sizes = [6, 1], strides = [1, 1]} : vector<6x5xf32> to vector<6x1xf32>
    %5 = vector.shape_cast %4 : vector<6x1xf32> to vector<6x1xf32>
    %6 = vector.broadcast %5 : vector<6x1xf32> to vector<6x2xf32>
    %7 = vector.extract_strided_slice %0 {offsets = [0, 2], sizes = [6, 1], strides = [1, 1]} : vector<6x5xf32> to vector<6x1xf32>
    %8 = vector.shape_cast %7 : vector<6x1xf32> to vector<6x1xf32>
    %9 = vector.broadcast %8 : vector<6x1xf32> to vector<6x2xf32>
    %10 = vector.extract_strided_slice %0 {offsets = [0, 3], sizes = [6, 1], strides = [1, 1]} : vector<6x5xf32> to vector<6x1xf32>
    %11 = vector.shape_cast %10 : vector<6x1xf32> to vector<6x1xf32>
    %12 = vector.broadcast %11 : vector<6x1xf32> to vector<6x2xf32>
    %13 = vector.extract_strided_slice %0 {offsets = [0, 4], sizes = [6, 1], strides = [1, 1]} : vector<6x5xf32> to vector<6x1xf32>
    %14 = vector.shape_cast %13 : vector<6x1xf32> to vector<6x1xf32>
    %15 = vector.broadcast %14 : vector<6x1xf32> to vector<6x2xf32>
    %c0_1 = arith.constant 0 : index
    %c0_2 = arith.constant 0 : index
    %16 = vector.load %arg3[%c0_1, %c0_2] : memref<6x1xf32, #tpu.memory_space<vmem>>, vector<6x1xf32>
    %17 = vector.shape_cast %16 : vector<6x1xf32> to vector<6x1xf32>
    %18 = vector.broadcast %17 : vector<6x1xf32> to vector<6x2xf32>
    %c0_3 = arith.constant 0 : index
    %c0_4 = arith.constant 0 : index
    %19 = vector.load %arg1[%c0_3, %c0_4] : memref<5x2xf32, #tpu.memory_space<vmem>>, vector<5x2xf32>
    %20 = vector.extract_strided_slice %19 {offsets = [0, 0], sizes = [1, 2], strides = [1, 1]} : vector<5x2xf32> to vector<1x2xf32>
    %21 = vector.broadcast %20 : vector<1x2xf32> to vector<6x2xf32>
    %22 = arith.mulf %3, %21 : vector<6x2xf32>
    %23 = arith.addf %18, %22 : vector<6x2xf32>
    %24 = vector.extract_strided_slice %19 {offsets = [1, 0], sizes = [1, 2], strides = [1, 1]} : vector<5x2xf32> to vector<1x2xf32>
    %25 = vector.broadcast %24 : vector<1x2xf32> to vector<6x2xf32>
    %26 = arith.mulf %6, %25 : vector<6x2xf32>
    %27 = arith.addf %23, %26 : vector<6x2xf32>
    %28 = vector.extract_strided_slice %19 {offsets = [2, 0], sizes = [1, 2], strides = [1, 1]} : vector<5x2xf32> to vector<1x2xf32>
    %29 = vector.broadcast %28 : vector<1x2xf32> to vector<6x2xf32>
    %30 = arith.mulf %9, %29 : vector<6x2xf32>
    %31 = arith.addf %27, %30 : vector<6x2xf32>
    %32 = vector.extract_strided_slice %19 {offsets = [3, 0], sizes = [1, 2], strides = [1, 1]} : vector<5x2xf32> to vector<1x2xf32>
    %33 = vector.broadcast %32 : vector<1x2xf32> to vector<6x2xf32>
    %34 = arith.mulf %12, %33 : vector<6x2xf32>
    %35 = arith.addf %31, %34 : vector<6x2xf32>
    %36 = vector.extract_strided_slice %19 {offsets = [4, 0], sizes = [1, 2], strides = [1, 1]} : vector<5x2xf32> to vector<1x2xf32>
    %37 = vector.broadcast %36 : vector<1x2xf32> to vector<6x2xf32>
    %38 = arith.mulf %15, %37 : vector<6x2xf32>
    %39 = arith.addf %35, %38 : vector<6x2xf32>
    %cst = arith.constant 0.000000e+00 : f32
    %40 = vector.broadcast %cst : f32 to vector<6x2xf32>
    %41 = arith.maximumf %39, %40 : vector<6x2xf32>
    %c0_5 = arith.constant 0 : index
    %c0_6 = arith.constant 0 : index
    %42 = vector.load %arg4[%c0_5, %c0_6] : memref<6x2xf32, #tpu.memory_space<vmem>>, vector<6x2xf32>
    tpu.vector_store %arg4[%c0_5, %c0_6], %41 {strides = array<i32>} : memref<6x2xf32, #tpu.memory_space<vmem>>, vector<6x2xf32>,
    return
  }
  func.func @transform_0(%arg0: i32) -> (i32, i32) {
    %c0_i32 = arith.constant 0 : i32
    %c0_i32_0 = arith.constant 0 : i32
    return %c0_i32, %arg0 : i32, i32
  }
  func.func @transform_1(%arg0: i32) -> (i32, i32) {
    %c0_i32 = arith.constant 0 : i32
    %c0_i32_0 = arith.constant 0 : i32
    %c0_i32_1 = arith.constant 0 : i32
    return %c0_i32, %c0_i32_0 : i32, i32
  }
  func.func @transform_2(%arg0: i32) -> (i32, i32) {
    %c0_i32 = arith.constant 0 : i32
    %c0_i32_0 = arith.constant 0 : i32
    %c0_i32_1 = arith.constant 0 : i32
    return %c0_i32, %c0_i32_0 : i32, i32
  }
  func.func @transform_3(%arg0: i32) -> (i32, i32) {
    %c0_i32 = arith.constant 0 : i32
    %c0_i32_0 = arith.constant 0 : i32
    return %c0_i32, %arg0 : i32, i32
  }
}

</mosaic_0001>

<llo_original>
// kernel: tpu_custom_call.1
$region0: #{tpu_custom_call.1}
  #allocation0 [shape = 'u32[]', space=smem, size = 0x4, offset = 0x4, fixed_abs, tag = 'smem constant byte address 0x4 - core index']
  #allocation1 [shape = 'u32[144,128]{1,0:T(1,128)}', space=vmem, size = 0x12000, scoped, tag = 'internal scratch']
  %s0 = inlined_call_operand.vmem [shape: f32[5,2], index: 0, kind: input, shape index: {}]
  %s1 = inlined_call_operand.vmem [shape: f32[6,5], index: 1, kind: input, shape index: {}]
  %s2 = inlined_call_operand.vmem [shape: f32[6,1], index: 2, kind: input, shape index: {}]
  %s3 = inlined_call_operand.vmem [shape: f32[6,2], index: 3, kind: output, shape index: {}]
  %s4 = sld [smem:[#allocation0]]
  $region22: #{tpu_custom_call.1} parent=0
    _
  %s6 = ssub.s32 1, %s4
  %s7 = scalar_select 0, %s6, %s4
  // Predicated region
  $region2: #{tpu_custom_call.1} parent=0 // pred_check
    _
  $region3: #{tpu_custom_call.1} parent=0 // pred_check_branch
    %9 = sbr.rel (0) target = $region5
  $region4: #{tpu_custom_call.1} parent=0 // pred_region
    _
  $region5: #{tpu_custom_call.1} parent=0 // pred_fallthru
    _
  // Predicated region
  $region6: #{tpu_custom_call.1} parent=0 // pred_check
    _
  $region7: #{tpu_custom_call.1} parent=0 // pred_check_branch
    %11 = sbr.rel (0) target = $region9
  $region8: #{tpu_custom_call.1} parent=0 // pred_region
    _
  $region9: #{tpu_custom_call.1} parent=0 // pred_fallthru
    _
  // Predicated region
  $region10: #{tpu_custom_call.1} parent=0 // pred_check
    _
  $region11: #{tpu_custom_call.1} parent=0 // pred_check_branch
    %13 = sbr.rel (0) target = $region13
  $region12: #{tpu_custom_call.1} parent=0 // pred_region
    _
  $region13: #{tpu_custom_call.1} parent=0 // pred_fallthru
    _
  %v14 = vld [vmem:[%s1] sm:$0x3f]
  %16 = vset.pattern.permute.xlu0 0
  %17 = vperm.xlu0 %16, %v14
  %v18 = vpop.permute.xlu0 %17
  %20 = vset.pattern.permute.xlu0 1
  %21 = vperm.xlu0 %20, %v14
  %v22 = vpop.permute.xlu0 %21
  %24 = vset.pattern.permute.xlu0 2
  %25 = vperm.xlu0 %24, %v14
  %v26 = vpop.permute.xlu0 %25
  %28 = vset.pattern.permute.xlu0 3
  %29 = vperm.xlu0 %28, %v14
  %v30 = vpop.permute.xlu0 %29
  %32 = vset.pattern.permute.xlu0 4
  %33 = vperm.xlu0 %32, %v14
  %v34 = vpop.permute.xlu0 %33
  %v36 = vld [vmem:[%s2] sm:$0x3f]
  %38 = vset.pattern.permute.xlu0 0
  %39 = vperm.xlu0 %38, %v36
  %v40 = vpop.permute.xlu0 %39
  %v42 = vld [vmem:[%s0] sm:$0x1f]
  %v43 = vlaneseq
  %v44 = vshrl.u32 %v43, 7
  %v45 = vsub.s32 0, %v44
  %v46 = vrot.slane %v42, %v45
  %v47 = vmul.f32 %v18, %v46
  %v48 = vadd.f32 %v40, %v47
  %v49 = vlaneseq
  %v50 = vshrl.u32 %v49, 7
  %v51 = vsub.s32 1, %v50
  %v52 = vrot.slane %v42, %v51
  %v53 = vmul.f32 %v22, %v52
  %v54 = vadd.f32 %v48, %v53
  %v55 = vlaneseq
  %v56 = vshrl.u32 %v55, 7
  %v57 = vsub.s32 2, %v56
  %v58 = vrot.slane %v42, %v57
  %v59 = vmul.f32 %v26, %v58
  %v60 = vadd.f32 %v54, %v59
  %v61 = vlaneseq
  %v62 = vshrl.u32 %v61, 7
  %v63 = vsub.s32 3, %v62
  %v64 = vrot.slane %v42, %v63
  %v65 = vmul.f32 %v30, %v64
  %v66 = vadd.f32 %v60, %v65
  %v67 = vlaneseq
  %v68 = vshrl.u32 %v67, 7
  %v69 = vsub.s32 4, %v68
  %v70 = vrot.slane %v42, %v69
  %v71 = vmul.f32 %v34, %v70
  %v72 = vadd.f32 %v66, %v71
  %v73 = vmax.f32 %v72, 0.0
  %vm74 = vcmask 13312
  %75 = vst.msk [vmem:[%s3] sm:$0x3f] %vm74, %v73
  // Predicated region
  $region14: #{tpu_custom_call.1} parent=0 // pred_check
    _
  $region15: #{tpu_custom_call.1} parent=0 // pred_check_branch
    %77 = sbr.rel (0) target = $region17
  $region16: #{tpu_custom_call.1} parent=0 // pred_region
    _
  $region17: #{tpu_custom_call.1} parent=0 // pred_fallthru
    _
  // Predicated region
  $region18: #{tpu_custom_call.1} parent=0 // pred_check
    _
  $region19: #{tpu_custom_call.1} parent=0 // pred_check_branch
    %79 = sbr.rel (0) target = $region21
  $region20: #{tpu_custom_call.1} parent=0 // pred_region
    _
  $region21: #{tpu_custom_call.1} parent=0 // pred_fallthru
    _

</llo_original>
